<compile_context>
chip_gen: v5e
topology: v5e:2x2
jax: 0.10.0
libtpu: 0.0.40
codegen_flags: <defaults>
</compile_context>

<pallas_src>
import functools
import math

import jax
import jax.numpy as jnp
import numpy as np
from jax.experimental import pallas as pl
from jax.experimental.pallas import tpu as pltpu


_DEFAULT_SCOPED_VMEM = 32 << 20   # scoped-VMEM default on v6e / v7x
_MAX_SCOPED_VMEM = 64 << 20       # v7x physical VMEM per TensorCore


def _round_up(x, m):
    return (x + m - 1) // m * m


def _compiler_params(dimension_semantics, est_vmem_bytes):
    """dimension_semantics plus an explicit VMEM budget only when the estimated
    working set exceeds the default scoped limit (production shapes)."""
    kwargs = dict(dimension_semantics=dimension_semantics)
    if est_vmem_bytes > _DEFAULT_SCOPED_VMEM:
        kwargs["vmem_limit_bytes"] = int(min(est_vmem_bytes, _MAX_SCOPED_VMEM))
    return pltpu.CompilerParams(**kwargs)


# ---------------------------------------------------------------------------
# Row-tiled linear with one shared x block and one or more (W, b) pairs:
#   y_i = x @ W_i + b_i
# Used for the fused QKV projection (3 outputs, x read once) and the output
# projection (1 output).
# ---------------------------------------------------------------------------
def _multi_linear_kernel(*refs, n_out):
    x_ref = refs[0]
    w_refs = refs[1:1 + n_out]
    b_refs = refs[1 + n_out:1 + 2 * n_out]
    o_refs = refs[1 + 2 * n_out:]
    x = x_ref[...]
    for w_ref, b_ref, o_ref in zip(w_refs, b_refs, o_refs):
        acc = jnp.dot(x, w_ref[...], preferred_element_type=jnp.float32)
        o_ref[...] = (acc + b_ref[...].astype(jnp.float32)).astype(o_ref.dtype)


def _fused_linear(x2d, weights_t, biases):
    """x2d: (M, K); weights_t[i]: (K, N_i); biases[i]: (1, N_i) -> tuple of (M, N_i)."""
    m, k = x2d.shape
    n_out = len(weights_t)
    nouts = [w.shape[1] for w in weights_t]

    # 512-row tiles (HBM-roofline sweet spot on v6e/v5e); pad M to a tile
    # multiple rather than falling back to a single giant block.
    tm = min(512, _round_up(m, 8))
    m_pad = _round_up(m, tm)
    if m_pad != m:
        x2d = jnp.pad(x2d, ((0, m_pad - m), (0, 0)))

    itm = x2d.dtype.itemsize
    est = 2 * (tm * k + sum(tm * n for n in nouts)) * itm      # dbl-buffered x / outs
    est += 2 * sum(k * n + n for n in nouts) * itm             # resident W, b
    est += 2 << 20
    # TODO(synk): for very large K*N_i (f32, E >= 1024) add K-tiling with a
    #             resident accumulator, or pass bf16 weights.

    outs = pl.pallas_call(
        functools.partial(_multi_linear_kernel, n_out=n_out),
        out_shape=tuple(jax.ShapeDtypeStruct((m_pad, n), x2d.dtype) for n in nouts),
        grid=(m_pad // tm,),
        in_specs=(
            [pl.BlockSpec((tm, k), lambda i: (i, 0))]
            + [pl.BlockSpec(w.shape, lambda i: (0, 0)) for w in weights_t]
            + [pl.BlockSpec(b.shape, lambda i: (0, 0)) for b in biases]
        ),
        out_specs=tuple(pl.BlockSpec((tm, n), lambda i: (i, 0)) for n in nouts),
        compiler_params=_compiler_params(("parallel",), est),
    )(x2d, *weights_t, *biases)

    if m_pad != m:
        outs = tuple(o[:m] for o in outs)
    return outs


# ---------------------------------------------------------------------------
# Flash-style attention core, grid = (B, q_tiles, kv_tiles), heads in-kernel.
# q/k/v blocks are packed (T, E) = (T, H*D) slabs; per-head slices are static
# lane windows.  Output block is a lane-dense (Tq, E) slab.
# ---------------------------------------------------------------------------
def _flash_attn_kernel(q_ref, k_ref, v_ref, o_ref, m_ref, l_ref, acc_ref, *,
                       num_heads, scale):
    kv = pl.program_id(2)

    @pl.when(kv == 0)
    def _():
        m_ref[...] = jnp.full(m_ref.shape, -jnp.inf, dtype=m_ref.dtype)
        l_ref[...] = jnp.zeros(l_ref.shape, dtype=l_ref.dtype)
        acc_ref[...] = jnp.zeros(acc_ref.shape, dtype=acc_ref.dtype)

    d = q_ref.shape[-1] // num_heads
    # Scale folded into q: one (Tq, E) VPU multiply per kv step instead of a
    # (Tq, Tkv) multiply per head per kv step.
    q_all = q_ref[...] * scale
    k_all = k_ref[...]
    v_all = v_ref[...]

    for h in range(num_heads):                 # static loop; H is small
        sl = slice(h * d, (h + 1) * d)
        q = q_all[:, sl]                       # (Tq, D)
        k = k_all[:, sl]                       # (Tkv, D)
        # (Tq, D) x (Tkv, D) contracted over D -> (Tq, Tkv), f32 accumulation.
        # TODO(synk): confirm via pl.lower_as_mlir that no per-step vxpose of
        #             the K tile is emitted; if it is, pre-layout K as
        #             (B, E, N) wrapper-side.
        s = jax.lax.dot_general(q, k, (((1,), (1,)), ((), ())),
                                preferred_element_type=jnp.float32)
        m_prev = m_ref[h]                                       # (Tq, 1)
        m_new = jnp.maximum(m_prev, jnp.max(s, axis=-1, keepdims=True))
        alpha = jnp.exp(m_prev - m_new)
        p = jnp.exp(s - m_new)
        l_ref[h] = alpha * l_ref[h] + jnp.sum(p, axis=-1, keepdims=True)
        acc_ref[h] = alpha * acc_ref[h] + jnp.dot(
            p.astype(v_all.dtype), v_all[:, sl],
            preferred_element_type=jnp.float32)
        m_ref[h] = m_new

    @pl.when(kv == pl.num_programs(2) - 1)
    def _():
        # Exact divide in the once-per-block finalize; the (Tq, E) output
        # block itself is lane-dense on HBM writeback.
        for h in range(num_heads):
            sl = slice(h * d, (h + 1) * d)
            o_ref[:, sl] = (acc_ref[h] / l_ref[h]).astype(o_ref.dtype)


def _pick_seq_tile(n, cap):
    if n <= cap:
        return n
    t = cap - cap % 8
    while t >= 8:
        if n % t == 0:
            return t
        t -= 8
    return n   # fallback: whole sequence resident (see TODO on padding/masking)


def _attention(q, k, v, *, num_heads, scale, tq, tkv):
    b, n, e = q.shape
    d = e // num_heads
    itm = q.dtype.itemsize
    est = 2 * (2 * tq * e + 2 * tkv * e) * itm             # dbl-buffered q/o + k/v
    est += num_heads * tq * (d + 2) * 4                    # f32 scratch m/l/acc
    est += 2 << 20

    kernel = functools.partial(_flash_attn_kernel, num_heads=num_heads, scale=scale)
    return pl.pallas_call(
        kernel,
        out_shape=jax.ShapeDtypeStruct((b, n, e), q.dtype),
        grid=(b, n // tq, n // tkv),
        in_specs=[
            pl.BlockSpec((pl.Squeezed(), tq, e), lambda bi, qi, ki: (bi, qi, 0)),
            pl.BlockSpec((pl.Squeezed(), tkv, e), lambda bi, qi, ki: (bi, ki, 0)),
            pl.BlockSpec((pl.Squeezed(), tkv, e), lambda bi, qi, ki: (bi, ki, 0)),
        ],
        out_specs=pl.BlockSpec((pl.Squeezed(), tq, e), lambda bi, qi, ki: (bi, qi, 0)),
        scratch_shapes=[
            pltpu.VMEM((num_heads, tq, 1), jnp.float32),   # running max  m
            pltpu.VMEM((num_heads, tq, 1), jnp.float32),   # running sum  l
            pltpu.VMEM((num_heads, tq, d), jnp.float32),   # unnormalized out
        ],
        compiler_params=_compiler_params(("parallel", "parallel", "arbitrary"), est),
    )(q, k, v)


# ---------------------------------------------------------------------------
# Module forward
# ---------------------------------------------------------------------------
def self_attention(x, wqkv_t, bqkv, wproj_t, bproj, *, num_heads):
    """Inference forward of minvit SelfAttention.

    x: (B, N, E); wqkv_t: (E, 3E) = W_qkv.T; bqkv: (1, 3E);
    wproj_t: (E, E) = W_proj.T; bproj: (1, E).
    """
    B, N, E = x.shape
    H = num_heads
    assert E % H == 0
    D = E // H
    scale = 1.0 / math.sqrt(D)

    x2d = x.reshape(B * N, E)

    # QKV projection: x read once, three lane-dense (B*N, E) outputs.
    # (Weight column splits are tiny/static; in production do them once at
    # parameter-load time.)
    wq_t, wk_t, wv_t = (wqkv_t[:, i * E:(i + 1) * E] for i in range(3))
    bq, bk, bv = (bqkv[:, i * E:(i + 1) * E] for i in range(3))
    q2d, k2d, v2d = _fused_linear(x2d, (wq_t, wk_t, wv_t), (bq, bk, bv))

    # Pure views -- no head-split transpose; heads handled inside the kernel.
    q = q2d.reshape(B, N, E)
    k = k2d.reshape(B, N, E)
    v = v2d.reshape(B, N, E)

    tq = _pick_seq_tile(N, 256)
    tkv = _pick_seq_tile(N, 512)
    o = _attention(q, k, v, num_heads=H, scale=scale, tq=tq, tkv=tkv)  # (B, N, E)

    # Output projection: (B, N, E) -> (B*N, E) is a pure view (no head-merge
    # transpose).
    (y2d,) = _fused_linear(o.reshape(B * N, E), (wproj_t,), (bproj,))

    # nn.Dropout (attention probs and projection output): inference identity.
    # TODO(synk): training-mode dropout via pltpu.prng_random_bits mask.
    return y2d.reshape(B, N, E)


# ---------------------------------------------------------------------------
# Pure-JAX reference
# ---------------------------------------------------------------------------
def _reference(x, wqkv_t, bqkv, wproj_t, bproj, num_heads):
    B, N, E = x.shape
    H = num_heads
    D = E // H
    qkv = x @ wqkv_t + bqkv                                        # (B, N, 3E)
    q, k, v = jnp.split(qkv, 3, axis=-1)

    def heads(t):
        return jnp.transpose(t.reshape(B, N, H, D), (0, 2, 1, 3))  # (B, H, N, D)

    q, k, v = heads(q), heads(k), heads(v)
    s = jnp.einsum('bhnd,bhmd->bhnm', q, k) * (D ** -0.5)
    p = jax.nn.softmax(s, axis=-1)
    o = jnp.einsum('bhnm,bhmd->bhnd', p, v)
    o = jnp.transpose(o, (0, 2, 1, 3)).reshape(B, N, E)
    return o @ wproj_t + bproj


if __name__ == "__main__":
    # Small config consistent with the module: embed_dim=32, num_heads=4.
    B, N, E, H = 2, 8, 32, 4

    key = jax.random.PRNGKey(0)
    kx, kw1, kb1, kw2, kb2 = jax.random.split(key, 5)

    x = jax.random.normal(kx, (B, N, E), dtype=jnp.float32)
    # PyTorch Linear shapes, pre-transposed: y = x @ W.T + b  ->  x @ w_t + b.
    wqkv_t = jax.random.normal(kw1, (E, 3 * E), dtype=jnp.float32) * 0.05
    bqkv = jax.random.normal(kb1, (1, 3 * E), dtype=jnp.float32) * 0.05
    wproj_t = jax.random.normal(kw2, (E, E), dtype=jnp.float32) * 0.05
    bproj = jax.random.normal(kb2, (1, E), dtype=jnp.float32) * 0.05

    out = self_attention(x, wqkv_t, bqkv, wproj_t, bproj, num_heads=H)
    out = jax.block_until_ready(out)

    ref = _reference(x, wqkv_t, bqkv, wproj_t, bproj, H)
    np.testing.assert_allclose(np.asarray(out), np.asarray(ref),
                               rtol=2e-3, atol=2e-3)
    print("KERNEL_OK")
</pallas_src>

<mosaic_0001>
module attributes {stable_mosaic.version = 11 : i64} {
  func.func @_multi_linear_kernel(%arg0: i32, %arg1: memref<16x32xf32, #tpu.memory_space<vmem>>, %arg2: memref<32x32xf32, #tpu.memory_space<vmem>>, %arg3: memref<32x32xf32, #tpu.memory_space<vmem>>, %arg4: memref<32x32xf32, #tpu.memory_space<vmem>>, %arg5: memref<1x32xf32, #tpu.memory_space<vmem>>, %arg6: memref<1x32xf32, #tpu.memory_space<vmem>>, %arg7: memref<1x32xf32, #tpu.memory_space<vmem>>, %arg8: memref<16x32xf32, #tpu.memory_space<vmem>>, %arg9: memref<16x32xf32, #tpu.memory_space<vmem>>, %arg10: memref<16x32xf32, #tpu.memory_space<vmem>>) attributes {dimension_semantics = [#tpu.dimension_semantics<parallel>], iteration_bounds = array<i64: 1>, scalar_prefetch = 0 : i64, scratch_operands = 0 : i64, tpu.core_type = #tpu.core_type<tc>, window_params = [{transform_indices = @transform_0, window_bounds = array<i64: 16, 32>}, {pipeline_mode = #tpu.pipeline_mode<synchronous>, transform_indices = @transform_1, window_bounds = array<i64: 32, 32>}, {pipeline_mode = #tpu.pipeline_mode<synchronous>, transform_indices = @transform_2, window_bounds = array<i64: 32, 32>}, {pipeline_mode = #tpu.pipeline_mode<synchronous>, transform_indices = @transform_3, window_bounds = array<i64: 32, 32>}, {pipeline_mode = #tpu.pipeline_mode<synchronous>, transform_indices = @transform_4, window_bounds = array<i64: 1, 32>}, {pipeline_mode = #tpu.pipeline_mode<synchronous>, transform_indices = @transform_5, window_bounds = array<i64: 1, 32>}, {pipeline_mode = #tpu.pipeline_mode<synchronous>, transform_indices = @transform_6, window_bounds = array<i64: 1, 32>}, {transform_indices = @transform_7, window_bounds = array<i64: 16, 32>}, {transform_indices = @transform_8, window_bounds = array<i64: 16, 32>}, {transform_indices = @transform_9, window_bounds = array<i64: 16, 32>}]} {
    %c0 = arith.constant 0 : index
    %c0_0 = arith.constant 0 : index
    %0 = vector.load %arg1[%c0, %c0_0] : memref<16x32xf32, #tpu.memory_space<vmem>>, vector<16x32xf32>
    %c0_1 = arith.constant 0 : index
    %c0_2 = arith.constant 0 : index
    %1 = vector.load %arg2[%c0_1, %c0_2] : memref<32x32xf32, #tpu.memory_space<vmem>>, vector<32x32xf32>
    %cst = arith.constant dense<0.000000e+00> : vector<16x32xf32>
    %2 = tpu.matmul %0, %1, %cst {dimension_numbers = #tpu.dot_dimension_numbers<[1], [0], [0], [1], [0, 0, 1, 1], [], []>} : vector<16x32xf32>, vector<32x32xf32>, vector<16x32xf32> -> vector<16x32xf32>
    %c0_3 = arith.constant 0 : index
    %c0_4 = arith.constant 0 : index
    %3 = vector.load %arg5[%c0_3, %c0_4] : memref<1x32xf32, #tpu.memory_space<vmem>>, vector<1x32xf32>
    %4 = vector.broadcast %3 : vector<1x32xf32> to vector<16x32xf32>
    %5 = arith.addf %2, %4 : vector<16x32xf32>
    %c0_5 = arith.constant 0 : index
    %c0_6 = arith.constant 0 : index
    %6 = vector.load %arg8[%c0_5, %c0_6] : memref<16x32xf32, #tpu.memory_space<vmem>>, vector<16x32xf32>
    tpu.vector_store %arg8[%c0_5, %c0_6], %5 {strides = array<i32>} : memref<16x32xf32, #tpu.memory_space<vmem>>, vector<16x32xf32>,
    %c0_7 = arith.constant 0 : index
    %c0_8 = arith.constant 0 : index
    %7 = vector.load %arg3[%c0_7, %c0_8] : memref<32x32xf32, #tpu.memory_space<vmem>>, vector<32x32xf32>
    %cst_9 = arith.constant dense<0.000000e+00> : vector<16x32xf32>
    %8 = tpu.matmul %0, %7, %cst_9 {dimension_numbers = #tpu.dot_dimension_numbers<[1], [0], [0], [1], [0, 0, 1, 1], [], []>} : vector<16x32xf32>, vector<32x32xf32>, vector<16x32xf32> -> vector<16x32xf32>
    %c0_10 = arith.constant 0 : index
    %c0_11 = arith.constant 0 : index
    %9 = vector.load %arg6[%c0_10, %c0_11] : memref<1x32xf32, #tpu.memory_space<vmem>>, vector<1x32xf32>
    %10 = vector.broadcast %9 : vector<1x32xf32> to vector<16x32xf32>
    %11 = arith.addf %8, %10 : vector<16x32xf32>
    %c0_12 = arith.constant 0 : index
    %c0_13 = arith.constant 0 : index
    %12 = vector.load %arg9[%c0_12, %c0_13] : memref<16x32xf32, #tpu.memory_space<vmem>>, vector<16x32xf32>
    tpu.vector_store %arg9[%c0_12, %c0_13], %11 {strides = array<i32>} : memref<16x32xf32, #tpu.memory_space<vmem>>, vector<16x32xf32>,
    %c0_14 = arith.constant 0 : index
    %c0_15 = arith.constant 0 : index
    %13 = vector.load %arg4[%c0_14, %c0_15] : memref<32x32xf32, #tpu.memory_space<vmem>>, vector<32x32xf32>
    %cst_16 = arith.constant dense<0.000000e+00> : vector<16x32xf32>
    %14 = tpu.matmul %0, %13, %cst_16 {dimension_numbers = #tpu.dot_dimension_numbers<[1], [0], [0], [1], [0, 0, 1, 1], [], []>} : vector<16x32xf32>, vector<32x32xf32>, vector<16x32xf32> -> vector<16x32xf32>
    %c0_17 = arith.constant 0 : index
    %c0_18 = arith.constant 0 : index
    %15 = vector.load %arg7[%c0_17, %c0_18] : memref<1x32xf32, #tpu.memory_space<vmem>>, vector<1x32xf32>
    %16 = vector.broadcast %15 : vector<1x32xf32> to vector<16x32xf32>
    %17 = arith.addf %14, %16 : vector<16x32xf32>
    %c0_19 = arith.constant 0 : index
    %c0_20 = arith.constant 0 : index
    %18 = vector.load %arg10[%c0_19, %c0_20] : memref<16x32xf32, #tpu.memory_space<vmem>>, vector<16x32xf32>
    tpu.vector_store %arg10[%c0_19, %c0_20], %17 {strides = array<i32>} : memref<16x32xf32, #tpu.memory_space<vmem>>, vector<16x32xf32>,
    return
  }
  func.func @transform_0(%arg0: i32) -> (i32, i32) {
    %c0_i32 = arith.constant 0 : i32
    %c0_i32_0 = arith.constant 0 : i32
    return %arg0, %c0_i32 : i32, i32
  }
  func.func @transform_1(%arg0: i32) -> (i32, i32) {
    %c0_i32 = arith.constant 0 : i32
    %c0_i32_0 = arith.constant 0 : i32
    %c0_i32_1 = arith.constant 0 : i32
    return %c0_i32, %c0_i32_0 : i32, i32
  }
  func.func @transform_2(%arg0: i32) -> (i32, i32) {
    %c0_i32 = arith.constant 0 : i32
    %c0_i32_0 = arith.constant 0 : i32
    %c0_i32_1 = arith.constant 0 : i32
    return %c0_i32, %c0_i32_0 : i32, i32
  }
  func.func @transform_3(%arg0: i32) -> (i32, i32) {
    %c0_i32 = arith.constant 0 : i32
    %c0_i32_0 = arith.constant 0 : i32
    %c0_i32_1 = arith.constant 0 : i32
    return %c0_i32, %c0_i32_0 : i32, i32
  }
  func.func @transform_4(%arg0: i32) -> (i32, i32) {
    %c0_i32 = arith.constant 0 : i32
    %c0_i32_0 = arith.constant 0 : i32
    %c0_i32_1 = arith.constant 0 : i32
    return %c0_i32, %c0_i32_0 : i32, i32
  }
  func.func @transform_5(%arg0: i32) -> (i32, i32) {
    %c0_i32 = arith.constant 0 : i32
    %c0_i32_0 = arith.constant 0 : i32
    %c0_i32_1 = arith.constant 0 : i32
    return %c0_i32, %c0_i32_0 : i32, i32
  }
  func.func @transform_6(%arg0: i32) -> (i32, i32) {
    %c0_i32 = arith.constant 0 : i32
    %c0_i32_0 = arith.constant 0 : i32
    %c0_i32_1 = arith.constant 0 : i32
    return %c0_i32, %c0_i32_0 : i32, i32
  }
  func.func @transform_7(%arg0: i32) -> (i32, i32) {
    %c0_i32 = arith.constant 0 : i32
    %c0_i32_0 = arith.constant 0 : i32
    return %arg0, %c0_i32 : i32, i32
  }
  func.func @transform_8(%arg0: i32) -> (i32, i32) {
    %c0_i32 = arith.constant 0 : i32
    %c0_i32_0 = arith.constant 0 : i32
    return %arg0, %c0_i32 : i32, i32
  }
  func.func @transform_9(%arg0: i32) -> (i32, i32) {
    %c0_i32 = arith.constant 0 : i32
    %c0_i32_0 = arith.constant 0 : i32
    return %arg0, %c0_i32 : i32, i32
  }
}

</mosaic_0001>

<llo_original>
// kernel: tpu_custom_call.1
$region0: #{tpu_custom_call.1}
  #allocation0 [shape = 'u32[]', space=smem, size = 0x4, offset = 0x4, fixed_abs, tag = 'smem constant byte address 0x4 - core index']
  #allocation1 [shape = 'u32[72,128]{1,0:T(1,128)}', space=vmem, size = 0x9000, scoped, tag = 'internal scratch']
  %s0 = inlined_call_operand.hbm [shape: f32[16,32], index: 0, kind: input, shape index: {}]
  %s1 = inlined_call_operand.hbm [shape: f32[32,32], index: 1, kind: input, shape index: {}]
  %s2 = inlined_call_operand.hbm [shape: f32[32,32], index: 2, kind: input, shape index: {}]
  %s3 = inlined_call_operand.hbm [shape: f32[32,32], index: 3, kind: input, shape index: {}]
  %s4 = inlined_call_operand.vmem [shape: f32[1,32], index: 4, kind: input, shape index: {}]
  %s5 = inlined_call_operand.vmem [shape: f32[1,32], index: 5, kind: input, shape index: {}]
  %s6 = inlined_call_operand.vmem [shape: f32[1,32], index: 6, kind: input, shape index: {}]
  %s7 = inlined_call_operand.hbm [shape: f32[16,32], index: 7, kind: output, shape index: {0}]
  %s8 = inlined_call_operand.hbm [shape: f32[16,32], index: 8, kind: output, shape index: {1}]
  %s9 = inlined_call_operand.hbm [shape: f32[16,32], index: 9, kind: output, shape index: {2}]
  %10 = xla_tuple %s7, %s8, %s9
  %s11 = sld [smem:[#allocation0]]
  $region70: #{tpu_custom_call.1} parent=0
    _
  %s13 = ssub.s32 1, %s11
  %s14 = scalar_select 0, %s13, %s11
  $region1: #{tpu_custom_call.1} parent=0
    #allocation2 [shape = 'u8[8192]{0}', space=vmem, size = 0x2000, scoped, tag = 'input window, operand 0, single buffered']
    #allocation3 [shape = 's32[1]{0}', space=sflag, size = 0x4, scoped, tag = 'scoped memory for tpu_custom_call.1']
    #allocation4 [shape = 's32[1]{0}', space=sflag, size = 0x4, scoped, tag = 'scoped memory for tpu_custom_call.1']
    #allocation5 [shape = 'u8[16384]{0}', space=vmem, size = 0x4000, scoped, tag = 'input window, operand 1, single buffered']
    #allocation6 [shape = 's32[1]{0}', space=sflag, size = 0x4, scoped, tag = 'scoped memory for tpu_custom_call.1']
    #allocation7 [shape = 'u8[16384]{0}', space=vmem, size = 0x4000, scoped, tag = 'input window, operand 2, single buffered']
    #allocation8 [shape = 'u8[16384]{0}', space=vmem, size = 0x4000, scoped, tag = 'input window, operand 3, single buffered']
    #allocation9 [shape = 's32[1]{0}', space=sflag, size = 0x4, scoped, tag = 'scoped memory for tpu_custom_call.1']
    #allocation10 [shape = 'u8[8192]{0}', space=vmem, size = 0x2000, scoped, tag = 'output window, operand 0, single buffered']
    #allocation11 [shape = 'u8[8192]{0}', space=vmem, size = 0x2000, scoped, tag = 'output window, operand 1, single buffered']
    #allocation12 [shape = 's32[1]{0}', space=sflag, size = 0x4, scoped, tag = 'scoped memory for tpu_custom_call.1']
    #allocation13 [shape = 'u8[8192]{0}', space=vmem, size = 0x2000, scoped, tag = 'output window, operand 2, single buffered']
    %15 = vsyncpa [#allocation3], 0
    %16 = vsyncpa [#allocation6], 0
    %17 = vsyncpa [#allocation9], 0
    %18 = vsyncpa [#allocation4], 0
    %19 = vsyncpa [#allocation12], 0
    // Predicated region
    $region2: #{tpu_custom_call.1} parent=1 // pred_check
      _
    $region3: #{tpu_custom_call.1} parent=1 // pred_check_branch
      %21 = sbr.rel (0) target = $region5
    $region4: #{tpu_custom_call.1} parent=1 // pred_region
      %23 = vsyncadd [#allocation3], 0
      %s24 = sshll.u32 %s0, 4
      %s25 = int_to_ptr.hbm [resolvable:$true] %s24
      %s26 = sshll.u32 [#allocation2], 4
      %s27 = int_to_ptr.vmem [resolvable:$true] %s26
      %32 = dma.hbm_to_vmem [thread:$0]  %s25, 256, %s27, [#allocation3], 128, 128, 8
    $region5: #{tpu_custom_call.1} parent=1 // pred_fallthru
      _
    // Predicated region
    $region6: #{tpu_custom_call.1} parent=1 // pred_check
      _
    $region7: #{tpu_custom_call.1} parent=1 // pred_check_branch
      %34 = sbr.rel (0) target = $region9
    $region8: #{tpu_custom_call.1} parent=1 // pred_region
      %36 = vsyncadd [#allocation6], 0
      %s37 = sshll.u32 %s1, 4
      %s38 = int_to_ptr.hbm [resolvable:$true] %s37
      %s39 = sshll.u32 [#allocation5], 4
      %s40 = int_to_ptr.vmem [resolvable:$true] %s39
      %45 = dma.hbm_to_vmem [thread:$0]  %s38, 512, %s40, [#allocation6], 128, 128, 8
    $region9: #{tpu_custom_call.1} parent=1 // pred_fallthru
      _
    // Predicated region
    $region10: #{tpu_custom_call.1} parent=1 // pred_check
      _
    $region11: #{tpu_custom_call.1} parent=1 // pred_check_branch
      %47 = sbr.rel (0) target = $region13
    $region12: #{tpu_custom_call.1} parent=1 // pred_region
      %49 = vsyncadd [#allocation6], 0
      %s50 = sshll.u32 %s2, 4
      %s51 = int_to_ptr.hbm [resolvable:$true] %s50
      %s52 = sshll.u32 [#allocation7], 4
      %s53 = int_to_ptr.vmem [resolvable:$true] %s52
      %58 = dma.hbm_to_vmem [thread:$0]  %s51, 512, %s53, [#allocation6], 128, 128, 8
    $region13: #{tpu_custom_call.1} parent=1 // pred_fallthru
      _
    // Predicated region
    $region14: #{tpu_custom_call.1} parent=1 // pred_check
      _
    $region15: #{tpu_custom_call.1} parent=1 // pred_check_branch
      %60 = sbr.rel (0) target = $region17
    $region16: #{tpu_custom_call.1} parent=1 // pred_region
      %62 = vsyncadd [#allocation9], 0
      %s63 = sshll.u32 %s3, 4
      %s64 = int_to_ptr.hbm [resolvable:$true] %s63
      %s65 = sshll.u32 [#allocation8], 4
      %s66 = int_to_ptr.vmem [resolvable:$true] %s65
      %71 = dma.hbm_to_vmem [thread:$0]  %s64, 512, %s66, [#allocation9], 128, 128, 8
    $region17: #{tpu_custom_call.1} parent=1 // pred_fallthru
      _
    // Predicated region
    $region18: #{tpu_custom_call.1} parent=1 // pred_check
      _
    $region19: #{tpu_custom_call.1} parent=1 // pred_check_branch
      %73 = sbr.rel (0) target = $region21
    $region20: #{tpu_custom_call.1} parent=1 // pred_region
      _
    $region21: #{tpu_custom_call.1} parent=1 // pred_fallthru
      _
    // Predicated region
    $region22: #{tpu_custom_call.1} parent=1 // pred_check
      _
    $region23: #{tpu_custom_call.1} parent=1 // pred_check_branch
      %75 = sbr.rel (0) target = $region25
    $region24: #{tpu_custom_call.1} parent=1 // pred_region
      _
    $region25: #{tpu_custom_call.1} parent=1 // pred_fallthru
      _
    // Predicated region
    $region26: #{tpu_custom_call.1} parent=1 // pred_check
      _
    $region27: #{tpu_custom_call.1} parent=1 // pred_check_branch
      %77 = sbr.rel (0) target = $region29
    $region28: #{tpu_custom_call.1} parent=1 // pred_region
      _
    $region29: #{tpu_custom_call.1} parent=1 // pred_fallthru
      _
    // Predicated region
    $region30: #{tpu_custom_call.1} parent=1 // pred_check
      _
    $region31: #{tpu_custom_call.1} parent=1 // pred_check_branch
      %79 = sbr.rel (0) target = $region33
    $region32: #{tpu_custom_call.1} parent=1 // pred_region
      %81 = dma.done [#allocation3], 256
    $region33: #{tpu_custom_call.1} parent=1 // pred_fallthru
      _
    // Predicated region
    $region34: #{tpu_custom_call.1} parent=1 // pred_check
      _
    $region35: #{tpu_custom_call.1} parent=1 // pred_check_branch
      %83 = sbr.rel (0) target = $region37
    $region36: #{tpu_custom_call.1} parent=1 // pred_region
      %85 = dma.done [#allocation6], 512
    $region37: #{tpu_custom_call.1} parent=1 // pred_fallthru
      _
    // Predicated region
    $region38: #{tpu_custom_call.1} parent=1 // pred_check
      _
    $region39: #{tpu_custom_call.1} parent=1 // pred_check_branch
      %87 = sbr.rel (0) target = $region41
    $region40: #{tpu_custom_call.1} parent=1 // pred_region
      %89 = dma.done [#allocation6], 512
    $region41: #{tpu_custom_call.1} parent=1 // pred_fallthru
      _
    // Predicated region
    $region42: #{tpu_custom_call.1} parent=1 // pred_check
      _
    $region43: #{tpu_custom_call.1} parent=1 // pred_check_branch
      %91 = sbr.rel (0) target = $region45
    $region44: #{tpu_custom_call.1} parent=1 // pred_region
      %93 = dma.done [#allocation9], 512
    $region45: #{tpu_custom_call.1} parent=1 // pred_fallthru
      _
    %v94 = vld [vmem:[#allocation2] sm:$0xff]
    %v95 = vld [vmem:[#allocation2 + $0x8] sm:$0xff]
    %v96 = vld [vmem:[#allocation5] sm:$0xff]
    %v97 = vld [vmem:[#allocation5 + $0x8] sm:$0xff]
    %v98 = vld [vmem:[#allocation5 + $0x10] sm:$0xff]
    %v99 = vld [vmem:[#allocation5 + $0x18] sm:$0xff]
    %v100 = vld [vmem:[%s4] sm:$0x1]
    %v102 = vperm.slane %v100, 0
    %vm104 = vcmask 261120
    %v106 = vsel %vm104, %v94, 0
    %v109 = vsel %vm104, %v95, 0
    %111 = vmatpush.msra.mxu0 0.0
    %112 = vmatpush.msra.mxu0 0.0
    %113 = vmatpush.msra.mxu0 0.0
    %114 = vmatpush.msra.mxu0 0.0
    %115 = vmatpush.msra.mxu0 0.0
    %116 = vmatpush.msra.mxu0 0.0
    %117 = vmatpush.msra.mxu0 0.0
    %118 = vmatpush.msra.mxu0 0.0
    %119 = vmatpush.msra.mxu0 0.0
    %120 = vmatpush.msra.mxu0 0.0
    %121 = vmatpush.msra.mxu0 0.0
    %122 = vmatpush.msra.mxu0 0.0
    %123 = vmatpush.msra.mxu0 %v99
    %124 = vmatpush.msra.mxu0 %v98
    %125 = vmatpush.msra.mxu0 %v97
    %126 = vmatpush.msra.mxu0 %v96
    %127 = vmatmul.f32.gmra.mxu0 %v106
    %v128 = vpop.f32.mrf.mxu0
    %v129 = vadd.f32 %v102, %v128
    %130 = vmatmul.f32.gmra.mxu0 %v109
    %v131 = vpop.f32.mrf.mxu0
    %v132 = vadd.f32 %v102, %v131
    %133 = vdwg.mxu0
    %134 = vst.msk [vmem:[#allocation10] sm:$0xff] %vm104, %v129
    %135 = vst.msk [vmem:[#allocation10 + $0x8] sm:$0xff] %vm104, %v132
    %v136 = vld [vmem:[#allocation7] sm:$0xff]
    %v137 = vld [vmem:[#allocation7 + $0x8] sm:$0xff]
    %v138 = vld [vmem:[#allocation7 + $0x10] sm:$0xff]
    %v139 = vld [vmem:[#allocation7 + $0x18] sm:$0xff]
    %v140 = vld [vmem:[%s5] sm:$0x1]
    %v142 = vperm.slane %v140, 0
    %144 = vmatpush.msra.mxu0 0.0
    %145 = vmatpush.msra.mxu0 0.0
    %146 = vmatpush.msra.mxu0 0.0
    %147 = vmatpush.msra.mxu0 0.0
    %148 = vmatpush.msra.mxu0 0.0
    %149 = vmatpush.msra.mxu0 0.0
    %150 = vmatpush.msra.mxu0 0.0
    %151 = vmatpush.msra.mxu0 0.0
    %152 = vmatpush.msra.mxu0 0.0
    %153 = vmatpush.msra.mxu0 0.0
    %154 = vmatpush.msra.mxu0 0.0
    %155 = vmatpush.msra.mxu0 0.0
    %156 = vmatpush.msra.mxu0 %v139
    %157 = vmatpush.msra.mxu0 %v138
    %158 = vmatpush.msra.mxu0 %v137
    %159 = vmatpush.msra.mxu0 %v136
    %160 = vmatmul.f32.gmra.mxu0 %v106
    %v161 = vpop.f32.mrf.mxu0
    %v162 = vadd.f32 %v142, %v161
    %163 = vmatmul.f32.gmra.mxu0 %v109
    %v164 = vpop.f32.mrf.mxu0
    %v165 = vadd.f32 %v142, %v164
    %166 = vdwg.mxu0
    %167 = vst.msk [vmem:[#allocation11] sm:$0xff] %vm104, %v162
    %168 = vst.msk [vmem:[#allocation11 + $0x8] sm:$0xff] %vm104, %v165
    %v169 = vld [vmem:[#allocation8] sm:$0xff]
    %v170 = vld [vmem:[#allocation8 + $0x8] sm:$0xff]
    %v171 = vld [vmem:[#allocation8 + $0x10] sm:$0xff]
    %v172 = vld [vmem:[#allocation8 + $0x18] sm:$0xff]
    %v173 = vld [vmem:[%s6] sm:$0x1]
    %v175 = vperm.slane %v173, 0
    %177 = vmatpush.msra.mxu0 0.0
    %178 = vmatpush.msra.mxu0 0.0
    %179 = vmatpush.msra.mxu0 0.0
    %180 = vmatpush.msra.mxu0 0.0
    %181 = vmatpush.msra.mxu0 0.0
    %182 = vmatpush.msra.mxu0 0.0
    %183 = vmatpush.msra.mxu0 0.0
    %184 = vmatpush.msra.mxu0 0.0
    %185 = vmatpush.msra.mxu0 0.0
    %186 = vmatpush.msra.mxu0 0.0
    %187 = vmatpush.msra.mxu0 0.0
    %188 = vmatpush.msra.mxu0 0.0
    %189 = vmatpush.msra.mxu0 %v172
    %190 = vmatpush.msra.mxu0 %v171
    %191 = vmatpush.msra.mxu0 %v170
    %192 = vmatpush.msra.mxu0 %v169
    %193 = vmatmul.f32.gmra.mxu0 %v106
    %v194 = vpop.f32.mrf.mxu0
    %v195 = vadd.f32 %v175, %v194
    %196 = vmatmul.f32.gmra.mxu0 %v109
    %v197 = vpop.f32.mrf.mxu0
    %v198 = vadd.f32 %v175, %v197
    %199 = vdwg.mxu0
    %200 = vst.msk [vmem:[#allocation13] sm:$0xff] %vm104, %v195
    %201 = vst.msk [vmem:[#allocation13 + $0x8] sm:$0xff] %vm104, %v198
    // Predicated region
    $region46: #{tpu_custom_call.1} parent=1 // pred_check
      _
    $region47: #{tpu_custom_call.1} parent=1 // pred_check_branch
      %203 = sbr.rel (0) target = $region49
    $region48: #{tpu_custom_call.1} parent=1 // pred_region
      %205 = vsyncadd [#allocation4], 0
      %s206 = sshll.u32 [#allocation10], 4
      %s207 = int_to_ptr.vmem [resolvable:$true] %s206
      %s208 = sshll.u32 %s7, 4
      %s209 = int_to_ptr.hbm [resolvable:$true] %s208
      %214 = dma.vmem_to_hbm [thread:$0]  %s207, 256, %s209, [#allocation4], 128, 128, 8
    $region49: #{tpu_custom_call.1} parent=1 // pred_fallthru
      _
    // Predicated region
    $region50: #{tpu_custom_call.1} parent=1 // pred_check
      _
    $region51: #{tpu_custom_call.1} parent=1 // pred_check_branch
      %216 = sbr.rel (0) target = $region53
    $region52: #{tpu_custom_call.1} parent=1 // pred_region
      %218 = vsyncadd [#allocation12], 0
      %s219 = sshll.u32 [#allocation11], 4
      %s220 = int_to_ptr.vmem [resolvable:$true] %s219
      %s221 = sshll.u32 %s8, 4
      %s222 = int_to_ptr.hbm [resolvable:$true] %s221
      %227 = dma.vmem_to_hbm [thread:$0]  %s220, 256, %s222, [#allocation12], 128, 128, 8
    $region53: #{tpu_custom_call.1} parent=1 // pred_fallthru
      _
    // Predicated region
    $region54: #{tpu_custom_call.1} parent=1 // pred_check
      _
    $region55: #{tpu_custom_call.1} parent=1 // pred_check_branch
      %229 = sbr.rel (0) target = $region57
    $region56: #{tpu_custom_call.1} parent=1 // pred_region
      %231 = vsyncadd [#allocation12], 0
      %s232 = sshll.u32 [#allocation13], 4
      %s233 = int_to_ptr.vmem [resolvable:$true] %s232
      %s234 = sshll.u32 %s9, 4
      %s235 = int_to_ptr.hbm [resolvable:$true] %s234
      %240 = dma.vmem_to_hbm [thread:$0]  %s233, 256, %s235, [#allocation12], 128, 128, 8
    $region57: #{tpu_custom_call.1} parent=1 // pred_fallthru
      _
    // Predicated region
    $region58: #{tpu_custom_call.1} parent=1 // pred_check
      _
    $region59: #{tpu_custom_call.1} parent=1 // pred_check_branch
      %242 = sbr.rel (0) target = $region61
    $region60: #{tpu_custom_call.1} parent=1 // pred_region
      %244 = dma.done [#allocation4], 256
    $region61: #{tpu_custom_call.1} parent=1 // pred_fallthru
      _
    // Predicated region
    $region62: #{tpu_custom_call.1} parent=1 // pred_check
      _
    $region63: #{tpu_custom_call.1} parent=1 // pred_check_branch
      %246 = sbr.rel (0) target = $region65
    $region64: #{tpu_custom_call.1} parent=1 // pred_region
      %248 = dma.done [#allocation12], 256
    $region65: #{tpu_custom_call.1} parent=1 // pred_fallthru
      _
    // Predicated region
    $region66: #{tpu_custom_call.1} parent=1 // pred_check
      _
    $region67: #{tpu_custom_call.1} parent=1 // pred_check_branch
      %250 = sbr.rel (0) target = $region69
    $region68: #{tpu_custom_call.1} parent=1 // pred_region
      %252 = dma.done [#allocation12], 256
    $region69: #{tpu_custom_call.1} parent=1 // pred_fallthru
      _
    %253 = vsyncpa [#allocation3], 1
    %254 = vsyncpa [#allocation6], 1
    %255 = vsyncpa [#allocation9], 1
    %256 = vsyncpa [#allocation4], 1
    %257 = vsyncpa [#allocation12], 1

</llo_original>
